<compile_context>
chip_gen: v7x
topology: tpu7x:2x2x1
jax: 0.10.0
libtpu: 0.0.40
codegen_flags: <defaults>
</compile_context>

<pallas_src>
import functools

import jax
import jax.numpy as jnp
from jax.experimental import pallas as pl
from jax.experimental.pallas import tpu as pltpu


def _colsq_kernel(d_ref, out_ref, *, rows, tm, kp, acc_rows, n_inner,
                  needs_mask):
    o = pl.program_id(0)          # parallel axis (row super-blocks)
    i = pl.program_id(1)          # reduction axis

    # Zero this super-block's partial accumulator on its first reduction step.
    @pl.when(i == 0)
    def _():
        out_ref[...] = jnp.zeros_like(out_ref)

    d = d_ref[...]
    if d.dtype != jnp.float32:
        d = d.astype(jnp.float32)   # accumulate in f32 (input may be bf16)

    if needs_mask:
        # Global (unclamped) row-block index; rows at or beyond `rows` are
        # garbage from a partial / redundant DMA tile and must contribute 0.
        gb = o * n_inner + i
        valid = rows - gb * tm                      # may be <=0 or > tm
        row_idx = jax.lax.broadcasted_iota(jnp.int32, (tm, kp), 0)
        d = jnp.where(row_idx < valid, d, 0.0)

    sq = d * d
    if acc_rows == 8:
        # Keep 8 sublane partial sums: pure vreg adds on the VALU, no per-tile
        # cross-sublane (XLU) reduce.  (tm is a multiple of 8 here.)
        contrib = jnp.sum(sq.reshape(tm // 8, 8, kp), axis=0)      # (8, kp)
    else:
        contrib = jnp.sum(sq, axis=0, keepdims=True)               # (1, kp)
    out_ref[...] += contrib.reshape(1, acc_rows, kp)


def constraint1_loss(D, *, tile_budget_bytes=2 * 1024 * 1024):
    """Pallas implementation of Constraint1.forward(D) for D of shape (M, K)."""
    M, K = D.shape

    # Lane packing: view `pack` consecutive rows as one lane-dense row.  This
    # is a free row-major reshape (no pad, no extra HBM traffic); column
    # sums-of-squares are additive across the packed lane groups.
    if K < 128 and 128 % K == 0 and M % (128 // K) == 0:
        pack = 128 // K
    else:
        pack = 1
    kp = pack * K
    rows = M // pack
    d_view = D.reshape(rows, kp) if pack > 1 else D

    # Row-tile size: as large as the VMEM budget allows (amortizes the fixed
    # per-grid-step overhead of this memory-bound kernel), sublane-aligned,
    # and never larger than the array (so only the LAST tile can be partial).
    itemsize = D.dtype.itemsize
    tm_cap = max(8, (tile_budget_bytes // (kp * itemsize)) // 8 * 8)
    if rows <= 8:
        tm = rows                          # full-extent block (always legal)
    else:
        tm = min(tm_cap, (rows // 8) * 8)
    g = -(-rows // tm)                     # number of row blocks

    # 2-D grid: outer parallel axis (2 super-blocks -> both TCs on v7x),
    # inner reduction axis.  Redundant clamped blocks are masked to zero.
    n_outer = 2 if g >= 2 else 1
    n_inner = -(-g // n_outer)
    needs_mask = (rows % tm != 0) or (n_outer * n_inner > g)
    acc_rows = 8 if tm % 8 == 0 else 1

    def in_map(o, i):
        gb = o * n_inner + i
        if n_outer * n_inner > g:          # static check
            gb = jnp.minimum(gb, g - 1)    # keep the DMA in bounds
        return (gb, 0)

    kernel = functools.partial(
        _colsq_kernel, rows=rows, tm=tm, kp=kp, acc_rows=acc_rows,
        n_inner=n_inner, needs_mask=needs_mask)

    partials = pl.pallas_call(
        kernel,
        out_shape=jax.ShapeDtypeStruct((n_outer, acc_rows, kp), jnp.float32),
        grid=(n_outer, n_inner),
        in_specs=[pl.BlockSpec((tm, kp), in_map)],
        out_specs=pl.BlockSpec((1, acc_rows, kp), lambda o, i: (o, 0, 0)),
        compiler_params=pltpu.CompilerParams(
            dimension_semantics=("parallel", "arbitrary"),
            vmem_limit_bytes=32 * 1024 * 1024),
        cost_estimate=pl.CostEstimate(
            flops=2 * M * K,
            transcendentals=0,
            bytes_accessed=M * K * itemsize + n_outer * acc_rows * kp * 4),
    )(d_view)

    # Tiny epilogue (pure XLA): fold sublane partials and lane groups back
    # onto the K true columns, then the diagonal Frobenius norm.
    col = jnp.sum(partials, axis=(0, 1))            # (kp,)
    if pack > 1:
        col = col.reshape(pack, K).sum(axis=0)      # (K,)
    diff = col - 1.0                                # diag((D.T@D) * I - I)
    return 0.001 * jnp.sqrt(jnp.sum(diff * diff))


def _reference(D):
    D = D.astype(jnp.float32)
    K = D.shape[1]
    I = jnp.eye(K, dtype=jnp.float32)
    G = D.T @ D
    return 0.001 * jnp.sqrt(jnp.sum((G * I - I) ** 2))


if __name__ == "__main__":
    key = jax.random.PRNGKey(0)

    def _check(D, **kw):
        loss = jax.block_until_ready(constraint1_loss(D, **kw))
        ref = jax.block_until_ready(_reference(D))
        assert jnp.allclose(loss, ref, rtol=1e-5, atol=1e-6), (loss, ref)

    # Shipped problem size: 128 rows, 32 subspace dims (one (32,128) packed
    # block, grid=(1,1)).
    _check(jax.random.normal(key, (128, 32), dtype=jnp.float32))

    # Row count divisible by pack but not by the tile -> in-kernel row mask.
    _check(jax.random.normal(jax.random.PRNGKey(1), (200, 32), jnp.float32))

    # Force a multi-tile, odd-block-count reduction: exercises the 2-D
    # (parallel, arbitrary) grid, the clamped index_map and redundant-block
    # masking.
    _check(jax.random.normal(jax.random.PRNGKey(2), (200, 32), jnp.float32),
           tile_budget_bytes=12288)

    # M not divisible by the lane-pack factor -> pack=1 fallback (narrow lanes).
    _check(jax.random.normal(jax.random.PRNGKey(3), (50, 32), jnp.float32))

    # Fewer than 8 packed rows -> full-extent (non-sublane-aligned) block.
    _check(jax.random.normal(jax.random.PRNGKey(4), (24, 32), jnp.float32))

    print("KERNEL_OK")
</pallas_src>

<mosaic_0001>
module attributes {stable_mosaic.version = 11 : i64} {
  func.func @_colsq_kernel(%arg0: i32, %arg1: i32, %arg2: memref<32x128xf32, #tpu.memory_space<vmem>>, %arg3: memref<1x8x128xf32, #tpu.memory_space<vmem>>) attributes {dimension_semantics = [#tpu.dimension_semantics<parallel>, #tpu.dimension_semantics<arbitrary>], iteration_bounds = array<i64: 1, 1>, scalar_prefetch = 0 : i64, scratch_operands = 0 : i64, tpu.core_type = #tpu.core_type<tc>, window_params = [{transform_indices = @transform_0, window_bounds = array<i64: 32, 128>}, {transform_indices = @transform_1, window_bounds = array<i64: 1, 8, 128>}]} {
    %c0_i32 = arith.constant 0 : i32
    %0 = arith.cmpi eq, %arg1, %c0_i32 : i32
    %1 = arith.extui %0 : i1 to i32
    %c0_i32_0 = arith.constant 0 : i32
    %2 = arith.cmpi ne, %1, %c0_i32_0 : i32
    scf.if %2 {
      %cst_8 = arith.constant 0.000000e+00 : f32
      %11 = vector.broadcast %cst_8 : f32 to vector<1x8x128xf32>
      %c0_9 = arith.constant 0 : index
      %c0_10 = arith.constant 0 : index
      %c0_11 = arith.constant 0 : index
      %12 = vector.load %arg3[%c0_9, %c0_10, %c0_11] : memref<1x8x128xf32, #tpu.memory_space<vmem>>, vector<1x8x128xf32>
      tpu.vector_store %arg3[%c0_9, %c0_10, %c0_11], %11 {strides = array<i32>} : memref<1x8x128xf32, #tpu.memory_space<vmem>>, vector<1x8x128xf32>,
    } else {
    }
    %c0 = arith.constant 0 : index
    %c0_1 = arith.constant 0 : index
    %3 = vector.load %arg2[%c0, %c0_1] : memref<32x128xf32, #tpu.memory_space<vmem>>, vector<32x128xf32>
    %4 = arith.mulf %3, %3 : vector<32x128xf32>
    %5 = vector.shape_cast %4 : vector<32x128xf32> to vector<4x8x128xf32>
    %cst = arith.constant dense<0.000000e+00> : vector<8x128xf32>
    %6 = vector.multi_reduction <add>, %5, %cst [0] : vector<4x8x128xf32> to vector<8x128xf32>
    %c0_2 = arith.constant 0 : index
    %c0_3 = arith.constant 0 : index
    %c0_4 = arith.constant 0 : index
    %7 = vector.load %arg3[%c0_2, %c0_3, %c0_4] : memref<1x8x128xf32, #tpu.memory_space<vmem>>, vector<1x8x128xf32>
    %8 = vector.shape_cast %6 : vector<8x128xf32> to vector<1x8x128xf32>
    %9 = arith.addf %7, %8 : vector<1x8x128xf32>
    %c0_5 = arith.constant 0 : index
    %c0_6 = arith.constant 0 : index
    %c0_7 = arith.constant 0 : index
    %10 = vector.load %arg3[%c0_5, %c0_6, %c0_7] : memref<1x8x128xf32, #tpu.memory_space<vmem>>, vector<1x8x128xf32>
    tpu.vector_store %arg3[%c0_5, %c0_6, %c0_7], %9 {strides = array<i32>} : memref<1x8x128xf32, #tpu.memory_space<vmem>>, vector<1x8x128xf32>,
    return
  }
  func.func @transform_0(%arg0: i32, %arg1: i32) -> (i32, i32) {
    %c1_i32 = arith.constant 1 : i32
    %0 = arith.muli %arg0, %c1_i32 : i32
    %1 = arith.addi %0, %arg1 : i32
    %c0_i32 = arith.constant 0 : i32
    %c0_i32_0 = arith.constant 0 : i32
    return %1, %c0_i32 : i32, i32
  }
  func.func @transform_1(%arg0: i32, %arg1: i32) -> (i32, i32, i32) {
    %c0_i32 = arith.constant 0 : i32
    %c0_i32_0 = arith.constant 0 : i32
    %c0_i32_1 = arith.constant 0 : i32
    return %arg0, %c0_i32, %c0_i32_0 : i32, i32, i32
  }
}

</mosaic_0001>

<llo_original>
// kernel: tpu_custom_call.1
$region0: #{tpu_custom_call.1}
  #allocation0 [shape = 'u32[]', space=smem, size = 0x4, offset = 0x4, fixed_abs, tag = 'smem constant byte address 0x4 - core index']
  #allocation1 [shape = 'u32[144,128]{1,0:T(1,128)}', space=vmem, size = 0x12000, scoped, tag = 'internal scratch']
  %s0 = inlined_call_operand.hbm [shape: f32[32,128], index: 0, kind: input, shape index: {}]
  %s1 = inlined_call_operand.hbm [shape: f32[1,8,128], index: 1, kind: output, shape index: {}]
  %s2 = sld [smem:[#allocation0]]
  $region22: #{tpu_custom_call.1} parent=0
    _
  %s4 = ssub.s32 1, %s2
  %s5 = scalar_select 0, %s4, %s2
  $region1: #{tpu_custom_call.1} parent=0
    #allocation2 [shape = 'u8[16384]{0}', space=vmem, size = 0x4000, scoped, tag = 'input window, operand 0, single buffered']
    #allocation3 [shape = 's32[1]{0}', space=sflag, size = 0x4, scoped, tag = 'scoped memory for tpu_custom_call.1']
    #allocation4 [shape = 's32[1]{0}', space=sflag, size = 0x4, scoped, tag = 'scoped memory for tpu_custom_call.1']
    #allocation5 [shape = 'u8[4096]{0}', space=vmem, size = 0x1000, scoped, tag = 'output window, operand 0, single buffered']
    %6 = vsyncpa [#allocation3], 0
    %7 = vsyncpa [#allocation4], 0
    // Predicated region
    $region2: #{tpu_custom_call.1} parent=1 // pred_check
      _
    $region3: #{tpu_custom_call.1} parent=1 // pred_check_branch
      %9 = sbr.rel (0) target = $region5
    $region4: #{tpu_custom_call.1} parent=1 // pred_region
      %s10 = sadd.s32 0, 0
      %s11 = smul.u32 4, %s10
      %s13 = ssub.s32 512, 512
      %14 = vsyncadd [#allocation3], %s13
      %s15 = smul.addr %s11, 128
      %s16 = scalar_lea.hbm %s0, %s15
      %s17 = sshll.u32 [#allocation2], 4
      %s18 = int_to_ptr.vmem [resolvable:$true] %s17
      %23 = dma.hbm_to_vmem [thread:$0]  %s16, 512, %s18, [#allocation3], 128, 128, 8
    $region5: #{tpu_custom_call.1} parent=1 // pred_fallthru
      _
    // Predicated region
    $region6: #{tpu_custom_call.1} parent=1 // pred_check
      _
    $region7: #{tpu_custom_call.1} parent=1 // pred_check_branch
      %25 = sbr.rel (0) target = $region9
    $region8: #{tpu_custom_call.1} parent=1 // pred_region
      %26 = dma.done [#allocation3], 512
    $region9: #{tpu_custom_call.1} parent=1 // pred_fallthru
      _
    %s27 = sadd.s32 0, 0
    %s28 = smul.u32 4, %s27
    %p29 = scmp.eq.s32.totalorder 0, 0
    // Predicated region
    $region10: #{tpu_custom_call.1} parent=1 // pred_check
      %p30 = pneg %p29
    $region11: #{tpu_custom_call.1} parent=1 // pred_check_branch
      %32 = sbr.rel (%p30) target = $region13
    $region12: #{tpu_custom_call.1} parent=1 // pred_region
      %33 = vst [vmem:[#allocation5] sm:$0xff] 0.0
    $region13: #{tpu_custom_call.1} parent=1 // pred_fallthru
      _
    %v34 = vld [vmem:[#allocation2] sm:$0xff]
    %v35 = vld [vmem:[#allocation2 + $0x8] sm:$0xff]
    %v36 = vld [vmem:[#allocation2 + $0x10] sm:$0xff]
    %v37 = vld [vmem:[#allocation2 + $0x18] sm:$0xff]
    %v38 = vmul.f32 %v34, %v34
    %v39 = vmul.f32 %v35, %v35
    %v40 = vmul.f32 %v36, %v36
    %v41 = vmul.f32 %v37, %v37
    %v42 = vadd.f32 %v38, %v39
    %v43 = vadd.f32 %v42, %v40
    %v44 = vadd.f32 %v43, %v41
    %v45 = vld [vmem:[#allocation5] sm:$0xff]
    %v46 = vadd.f32 %v45, %v44
    %47 = vst [vmem:[#allocation5] sm:$0xff] %v46
    // Predicated region
    $region14: #{tpu_custom_call.1} parent=1 // pred_check
      _
    $region15: #{tpu_custom_call.1} parent=1 // pred_check_branch
      %49 = sbr.rel (0) target = $region17
    $region16: #{tpu_custom_call.1} parent=1 // pred_region
      %s51 = ssub.s32 128, 128
      %52 = vsyncadd [#allocation4], %s51
      %s54 = sshll.u32 [#allocation5], 4
      %s55 = int_to_ptr.vmem [resolvable:$true] %s54
      %57 = dma.vmem_to_hbm [thread:$0]  %s55, 128, %s1, [#allocation4]
    $region17: #{tpu_custom_call.1} parent=1 // pred_fallthru
      _
    // Predicated region
    $region18: #{tpu_custom_call.1} parent=1 // pred_check
      _
    $region19: #{tpu_custom_call.1} parent=1 // pred_check_branch
      %59 = sbr.rel (0) target = $region21
    $region20: #{tpu_custom_call.1} parent=1 // pred_region
      %60 = dma.done [#allocation4], 128
    $region21: #{tpu_custom_call.1} parent=1 // pred_fallthru
      _
    %61 = vsyncpa [#allocation3], 1
    %62 = vsyncpa [#allocation4], 1

</llo_original>
